<compile_context>
chip_gen: v5e
topology: v5e:2x2
jax: 0.10.0
libtpu: 0.0.40
codegen_flags: <defaults>
</compile_context>

<pallas_src>
import functools

import jax
import jax.numpy as jnp
from jax.experimental import pallas as pl
from jax.experimental.pallas import tpu as pltpu


def _round_up(x, m):
    return ((x + m - 1) // m) * m


def _linear_kernel(x_ref, w_ref, b_ref, o_ref, acc_ref, *, act=None):
    # Grid = (M tiles, N tiles, K tiles); K (reduction) is the innermost axis.
    @pl.when(pl.program_id(2) == 0)
    def _init():
        acc_ref[...] = jnp.zeros_like(acc_ref)

    # MXU matmul with f32 accumulation; W already (K, N) -> no in-kernel
    # transpose (no XLU work).
    acc_ref[...] += jnp.dot(x_ref[...], w_ref[...],
                            preferred_element_type=jnp.float32)

    @pl.when(pl.program_id(2) == pl.num_programs(2) - 1)
    def _finalize():
        y = acc_ref[...] + b_ref[...]          # bias kept in f32
        if act is not None:
            y = act(y)
        o_ref[...] = y.astype(o_ref.dtype)


def linear_forward(x, weight, bias, act=None, *,
                   block_m=256, block_n=256, block_k=512,
                   compute_dtype=None, out_dtype=None):
    """Pallas equivalent of Model.forward: Linear(inp, oup) (+ optional act).

    x:      (M, K)  activations
    weight: (N, K)  torch.nn.Linear.weight layout
    bias:   (N,)
    """
    M, K = x.shape
    N, K2 = weight.shape
    assert K == K2
    if out_dtype is None:
        out_dtype = x.dtype
    cdtype = x.dtype if compute_dtype is None else compute_dtype

    # ---- adaptive tile sizes (respect the (8, 128) block constraint) -------
    # Either the tile equals the full dim, or it is 8/128-aligned; ragged edge
    # blocks (dim not divisible by tile) are handled by the Pallas pipeline.
    tm = M if M <= block_m else block_m            # block_m % 8 == 0
    tn = N if N <= block_n else block_n            # block_n % 128 == 0
    if K <= block_k:
        tk, K_p = K, K                             # single K block, no padding
    else:
        tk = block_k                               # block_k % 128 == 0
        K_p = _round_up(K, tk)                     # pad only if K % tk != 0

    # ---- wrapper-side operand prep (single fused pass per operand) ---------
    # Weight: (N, K) -> (K, N) lane-dense RHS, cast, and (rare) K pad in one go.
    w_t = weight.T.astype(cdtype)
    x_in = x.astype(cdtype)
    if K_p != K:
        # Only when K is tiled and ragged: zero-pad the reduction axis so the
        # last K block does not accumulate garbage.
        w_t = jnp.pad(w_t, ((0, K_p - K), (0, 0)))
        x_in = jnp.pad(x_in, ((0, 0), (0, K_p - K)))
    b2 = bias.reshape(1, N).astype(jnp.float32)

    grid = (pl.cdiv(M, tm), pl.cdiv(N, tn), K_p // tk)

    itemsize = jnp.dtype(cdtype).itemsize
    cost = pl.CostEstimate(
        flops=2 * M * K * N,
        bytes_accessed=(M * K_p * itemsize + K_p * N * itemsize
                        + N * 4 + M * N * jnp.dtype(out_dtype).itemsize),
        transcendentals=0,
    )

    kernel = functools.partial(_linear_kernel, act=act)
    return pl.pallas_call(
        kernel,
        out_shape=jax.ShapeDtypeStruct((M, N), out_dtype),
        grid_spec=pltpu.PrefetchScalarGridSpec(
            num_scalar_prefetch=0,
            grid=grid,
            in_specs=[
                pl.BlockSpec((tm, tk), lambda i, j, k: (i, k)),   # activations
                pl.BlockSpec((tk, tn), lambda i, j, k: (k, j)),   # weight (K,N)
                pl.BlockSpec((1, tn), lambda i, j, k: (0, j)),    # bias
            ],
            out_specs=pl.BlockSpec((tm, tn), lambda i, j, k: (i, j)),
            scratch_shapes=[pltpu.VMEM((tm, tn), jnp.float32)],   # f32 accumulator
        ),
        compiler_params=pltpu.CompilerParams(
            dimension_semantics=("parallel", "parallel", "arbitrary"),
        ),
        cost_estimate=cost,
    )(x_in, w_t, b2)


if __name__ == "__main__":
    key = jax.random.PRNGKey(0)
    kx, kw, kb = jax.random.split(key, 3)

    inp, oup = 64, 32
    bound = 1.0 / (inp ** 0.5)
    weight = jax.random.uniform(kw, (oup, inp), minval=-bound, maxval=bound,
                                dtype=jnp.float32)
    bias = jax.random.uniform(kb, (oup,), minval=-bound, maxval=bound,
                              dtype=jnp.float32)

    # 1) Exact module shape: x1 = torch.randn(1, 64), act=None -> v2 = v1.
    x1 = jax.random.normal(kx, (1, inp), dtype=jnp.float32)
    out1 = jax.block_until_ready(linear_forward(x1, weight, bias, act=None))
    ref1 = x1 @ weight.T + bias
    assert out1.shape == (1, oup)
    assert jnp.allclose(out1, ref1, atol=1e-5, rtol=1e-5)

    # 2) Small sublane-aligned batch.
    xb = jax.random.normal(kx, (8, inp), dtype=jnp.float32)
    outb = jax.block_until_ready(linear_forward(xb, weight, bias, act=None))
    refb = xb @ weight.T + bias
    assert jnp.allclose(outb, refb, atol=1e-5, rtol=1e-5)

    # 3) bf16 operand fast path (MXU bf16 peak on v6e/v7x), f32 accumulate.
    out_bf = jax.block_until_ready(
        linear_forward(xb, weight, bias, act=None, compute_dtype=jnp.bfloat16))
    assert jnp.allclose(out_bf, refb, atol=5e-2, rtol=5e-2)

    # 4) Exercise the M/N/K tiled path at small scale: ragged M and N edge
    #    blocks, K tiled + padded, f32 accumulator across K, elementwise act.
    kx2, kw2, kb2 = jax.random.split(jax.random.PRNGKey(1), 3)
    M2, K2_, N2 = 40, 320, 160
    x2 = jax.random.normal(kx2, (M2, K2_), dtype=jnp.float32)
    w2 = jax.random.normal(kw2, (N2, K2_), dtype=jnp.float32) * 0.05
    b2 = jax.random.normal(kb2, (N2,), dtype=jnp.float32)
    out2 = jax.block_until_ready(
        linear_forward(x2, w2, b2, act=jax.nn.relu,
                       block_m=128, block_n=128, block_k=128))
    ref2 = jax.nn.relu(x2 @ w2.T + b2)
    assert out2.shape == (M2, N2)
    assert jnp.allclose(out2, ref2, atol=1e-4, rtol=1e-4)

    print("KERNEL_OK")
</pallas_src>

<mosaic_0001>
module attributes {stable_mosaic.version = 11 : i64} {
  func.func @_linear_kernel(%arg0: i32, %arg1: i32, %arg2: i32, %arg3: memref<1x64xf32, #tpu.memory_space<vmem>>, %arg4: memref<64x32xf32, #tpu.memory_space<vmem>>, %arg5: memref<1x32xf32, #tpu.memory_space<vmem>>, %arg6: memref<1x32xf32, #tpu.memory_space<vmem>>, %arg7: memref<1x32xf32, #tpu.memory_space<vmem>>) attributes {dimension_semantics = [#tpu.dimension_semantics<parallel>, #tpu.dimension_semantics<parallel>, #tpu.dimension_semantics<arbitrary>], iteration_bounds = array<i64: 1, 1, 1>, scalar_prefetch = 0 : i64, scratch_operands = 1 : i64, tpu.core_type = #tpu.core_type<tc>, window_params = [{transform_indices = @transform_0, window_bounds = array<i64: 1, 64>}, {transform_indices = @transform_1, window_bounds = array<i64: 64, 32>}, {transform_indices = @transform_2, window_bounds = array<i64: 1, 32>}, {transform_indices = @transform_3, window_bounds = array<i64: 1, 32>}]} {
    %c0_i32 = arith.constant 0 : i32
    %0 = arith.cmpi eq, %arg2, %c0_i32 : i32
    %1 = arith.extui %0 : i1 to i32
    %c0_i32_0 = arith.constant 0 : i32
    %2 = arith.cmpi ne, %1, %c0_i32_0 : i32
    scf.if %2 {
      %cst_10 = arith.constant 0.000000e+00 : f32
      %12 = vector.broadcast %cst_10 : f32 to vector<1x32xf32>
      %c0_11 = arith.constant 0 : index
      %c0_12 = arith.constant 0 : index
      %13 = vector.load %arg7[%c0_11, %c0_12] : memref<1x32xf32, #tpu.memory_space<vmem>>, vector<1x32xf32>
      tpu.vector_store %arg7[%c0_11, %c0_12], %12 {strides = array<i32>} : memref<1x32xf32, #tpu.memory_space<vmem>>, vector<1x32xf32>,
    } else {
    }
    %c0 = arith.constant 0 : index
    %c0_1 = arith.constant 0 : index
    %3 = vector.load %arg7[%c0, %c0_1] : memref<1x32xf32, #tpu.memory_space<vmem>>, vector<1x32xf32>
    %c0_2 = arith.constant 0 : index
    %c0_3 = arith.constant 0 : index
    %4 = vector.load %arg3[%c0_2, %c0_3] : memref<1x64xf32, #tpu.memory_space<vmem>>, vector<1x64xf32>
    %c0_4 = arith.constant 0 : index
    %c0_5 = arith.constant 0 : index
    %5 = vector.load %arg4[%c0_4, %c0_5] : memref<64x32xf32, #tpu.memory_space<vmem>>, vector<64x32xf32>
    %cst = arith.constant dense<0.000000e+00> : vector<1x32xf32>
    %6 = tpu.matmul %4, %5, %cst {dimension_numbers = #tpu.dot_dimension_numbers<[1], [0], [0], [1], [0, 0, 1, 1], [], []>} : vector<1x64xf32>, vector<64x32xf32>, vector<1x32xf32> -> vector<1x32xf32>
    %7 = arith.addf %3, %6 : vector<1x32xf32>
    %c0_6 = arith.constant 0 : index
    %c0_7 = arith.constant 0 : index
    %8 = vector.load %arg7[%c0_6, %c0_7] : memref<1x32xf32, #tpu.memory_space<vmem>>, vector<1x32xf32>
    tpu.vector_store %arg7[%c0_6, %c0_7], %7 {strides = array<i32>} : memref<1x32xf32, #tpu.memory_space<vmem>>, vector<1x32xf32>,
    %c0_i32_8 = arith.constant 0 : i32
    %9 = arith.cmpi eq, %arg2, %c0_i32_8 : i32
    %10 = arith.extui %9 : i1 to i32
    %c0_i32_9 = arith.constant 0 : i32
    %11 = arith.cmpi ne, %10, %c0_i32_9 : i32
    scf.if %11 {
      %c0_10 = arith.constant 0 : index
      %c0_11 = arith.constant 0 : index
      %12 = vector.load %arg7[%c0_10, %c0_11] : memref<1x32xf32, #tpu.memory_space<vmem>>, vector<1x32xf32>
      %c0_12 = arith.constant 0 : index
      %c0_13 = arith.constant 0 : index
      %13 = vector.load %arg5[%c0_12, %c0_13] : memref<1x32xf32, #tpu.memory_space<vmem>>, vector<1x32xf32>
      %14 = arith.addf %12, %13 : vector<1x32xf32>
      %c0_14 = arith.constant 0 : index
      %c0_15 = arith.constant 0 : index
      %15 = vector.load %arg6[%c0_14, %c0_15] : memref<1x32xf32, #tpu.memory_space<vmem>>, vector<1x32xf32>
      tpu.vector_store %arg6[%c0_14, %c0_15], %14 {strides = array<i32>} : memref<1x32xf32, #tpu.memory_space<vmem>>, vector<1x32xf32>,
    } else {
    }
    return
  }
  func.func @transform_0(%arg0: i32, %arg1: i32, %arg2: i32) -> (i32, i32) {
    %c0_i32 = arith.constant 0 : i32
    return %arg0, %arg2 : i32, i32
  }
  func.func @transform_1(%arg0: i32, %arg1: i32, %arg2: i32) -> (i32, i32) {
    %c0_i32 = arith.constant 0 : i32
    return %arg2, %arg1 : i32, i32
  }
  func.func @transform_2(%arg0: i32, %arg1: i32, %arg2: i32) -> (i32, i32) {
    %c0_i32 = arith.constant 0 : i32
    %c0_i32_0 = arith.constant 0 : i32
    return %c0_i32, %arg1 : i32, i32
  }
  func.func @transform_3(%arg0: i32, %arg1: i32, %arg2: i32) -> (i32, i32) {
    %c0_i32 = arith.constant 0 : i32
    return %arg0, %arg1 : i32, i32
  }
}

</mosaic_0001>

<llo_original>
// kernel: tpu_custom_call.1
$region0: #{tpu_custom_call.1}
  #allocation0 [shape = 'u32[]', space=smem, size = 0x4, offset = 0x4, fixed_abs, tag = 'smem constant byte address 0x4 - core index']
  #allocation1 [shape = 'u32[72,128]{1,0:T(1,128)}', space=vmem, size = 0x9000, scoped, tag = 'internal scratch']
  #allocation2 [shape = 'f32[1,32]{1,0:T(1,128)}', space=vmem, size = 0x200, scoped, tag = 'scratch operand']
  %s0 = inlined_call_operand.vmem [shape: f32[1,64], index: 0, kind: input, shape index: {}]
  %s1 = inlined_call_operand.vmem [shape: f32[64,32], index: 1, kind: input, shape index: {}]
  %s2 = inlined_call_operand.vmem [shape: f32[1,32], index: 2, kind: input, shape index: {}]
  %s3 = inlined_call_operand.hbm [shape: f32[1,32], index: 3, kind: output, shape index: {}]
  %s4 = sld [smem:[#allocation0]]
  $region30: #{tpu_custom_call.1} parent=0
    _
  %s6 = ssub.s32 1, %s4
  %s7 = scalar_select 0, %s6, %s4
  $region1: #{tpu_custom_call.1} parent=0
    #allocation3 [shape = 'u8[512]{0}', space=vmem, size = 0x400, scoped, tag = 'output window, operand 0, single buffered']
    #allocation4 [shape = 's32[1]{0}', space=sflag, size = 0x4, scoped, tag = 'scoped memory for tpu_custom_call.1']
    %8 = vsyncpa [#allocation4], 0
    // Predicated region
    $region2: #{tpu_custom_call.1} parent=1 // pred_check
      _
    $region3: #{tpu_custom_call.1} parent=1 // pred_check_branch
      %10 = sbr.rel (0) target = $region5
    $region4: #{tpu_custom_call.1} parent=1 // pred_region
      _
    $region5: #{tpu_custom_call.1} parent=1 // pred_fallthru
      _
    // Predicated region
    $region6: #{tpu_custom_call.1} parent=1 // pred_check
      _
    $region7: #{tpu_custom_call.1} parent=1 // pred_check_branch
      %12 = sbr.rel (0) target = $region9
    $region8: #{tpu_custom_call.1} parent=1 // pred_region
      _
    $region9: #{tpu_custom_call.1} parent=1 // pred_fallthru
      _
    // Predicated region
    $region10: #{tpu_custom_call.1} parent=1 // pred_check
      _
    $region11: #{tpu_custom_call.1} parent=1 // pred_check_branch
      %14 = sbr.rel (0) target = $region13
    $region12: #{tpu_custom_call.1} parent=1 // pred_region
      _
    $region13: #{tpu_custom_call.1} parent=1 // pred_fallthru
      _
    %p15 = scmp.eq.s32.totalorder 0, 0
    // Predicated region
    $region14: #{tpu_custom_call.1} parent=1 // pred_check
      %p16 = pneg %p15
    $region15: #{tpu_custom_call.1} parent=1 // pred_check_branch
      %18 = sbr.rel (%p16) target = $region17
    $region16: #{tpu_custom_call.1} parent=1 // pred_region
      %vm19 = vcmask 253952
      %20 = vst.msk [vmem:[#allocation2] sm:$0x1] %vm19, 0.0
    $region17: #{tpu_custom_call.1} parent=1 // pred_fallthru
      _
    %v21 = vld [vmem:[#allocation2] sm:$0x1]
    %v22 = vld [vmem:[%s0] sm:$0x1]
    %v23 = vld [vmem:[%s1] sm:$0xff]
    %v24 = vld [vmem:[%s1 + $0x8] sm:$0xff]
    %v25 = vld [vmem:[%s1 + $0x10] sm:$0xff]
    %v26 = vld [vmem:[%s1 + $0x18] sm:$0xff]
    %v27 = vld [vmem:[%s1 + $0x20] sm:$0xff]
    %v28 = vld [vmem:[%s1 + $0x28] sm:$0xff]
    %v29 = vld [vmem:[%s1 + $0x30] sm:$0xff]
    %v30 = vld [vmem:[%s1 + $0x38] sm:$0xff]
    %vm31 = vcmask 523264
    %v33 = vsel %vm31, %v22, 0
    %35 = vmatpush.msra.mxu0 0.0
    %36 = vmatpush.msra.mxu0 0.0
    %37 = vmatpush.msra.mxu0 0.0
    %38 = vmatpush.msra.mxu0 0.0
    %39 = vmatpush.msra.mxu0 0.0
    %40 = vmatpush.msra.mxu0 0.0
    %41 = vmatpush.msra.mxu0 0.0
    %42 = vmatpush.msra.mxu0 0.0
    %43 = vmatpush.msra.mxu0 %v30
    %44 = vmatpush.msra.mxu0 %v29
    %45 = vmatpush.msra.mxu0 %v28
    %46 = vmatpush.msra.mxu0 %v27
    %47 = vmatpush.msra.mxu0 %v26
    %48 = vmatpush.msra.mxu0 %v25
    %49 = vmatpush.msra.mxu0 %v24
    %50 = vmatpush.msra.mxu0 %v23
    %51 = vmatmul.f32.gmra.mxu0 %v33
    %v52 = vpop.f32.mrf.mxu0
    %v53 = vadd.f32 0.0, %v52
    %54 = vdwg.mxu0
    %v55 = vadd.f32 %v21, %v53
    %vm56 = vcmask 253952
    %57 = vst.msk [vmem:[#allocation2] sm:$0x1] %vm56, %v55
    // Predicated region
    $region18: #{tpu_custom_call.1} parent=1 // pred_check
      %p58 = pneg %p15
    $region19: #{tpu_custom_call.1} parent=1 // pred_check_branch
      %60 = sbr.rel (%p58) target = $region21
    $region20: #{tpu_custom_call.1} parent=1 // pred_region
      %v61 = vld [vmem:[#allocation2] sm:$0x1]
      %v62 = vld [vmem:[%s2] sm:$0x1]
      %v63 = vadd.f32 %v61, %v62
      %64 = vst.msk [vmem:[#allocation3] sm:$0x1] %vm56, %v63
    $region21: #{tpu_custom_call.1} parent=1 // pred_fallthru
      _
    // Predicated region
    $region22: #{tpu_custom_call.1} parent=1 // pred_check
      _
    $region23: #{tpu_custom_call.1} parent=1 // pred_check_branch
      %66 = sbr.rel (0) target = $region25
    $region24: #{tpu_custom_call.1} parent=1 // pred_region
      %68 = vsyncadd [#allocation4], 0
      %s70 = sshll.u32 [#allocation3], 4
      %s71 = int_to_ptr.vmem [resolvable:$true] %s70
      %s72 = sshll.u32 %s3, 4
      %s73 = int_to_ptr.hbm [resolvable:$true] %s72
      %75 = dma.vmem_to_hbm [thread:$0]  %s71, 16, %s73, [#allocation4]
    $region25: #{tpu_custom_call.1} parent=1 // pred_fallthru
      _
    // Predicated region
    $region26: #{tpu_custom_call.1} parent=1 // pred_check
      _
    $region27: #{tpu_custom_call.1} parent=1 // pred_check_branch
      %77 = sbr.rel (0) target = $region29
    $region28: #{tpu_custom_call.1} parent=1 // pred_region
      %79 = dma.done [#allocation4], 16
    $region29: #{tpu_custom_call.1} parent=1 // pred_fallthru
      _
    %80 = vsyncpa [#allocation4], 1

</llo_original>
